<compile_context>
chip_gen: v7x
topology: tpu7x:2x2x1
jax: 0.10.0
libtpu: 0.0.40
codegen_flags: <defaults>
</compile_context>

<pallas_src>
import functools
import math

import jax
import jax.numpy as jnp
from jax.experimental import pallas as pl
from jax.experimental.pallas import tpu as pltpu


def _qkv_kernel(q_ref, k_ref, v_ref,
                wq_ref, wk_ref, wv_ref,
                bq_ref, bk_ref, bv_ref,
                qo_ref, ko_ref, vo_ref,
                *, compute_dtype):
    """Computes one (tm, tn) output tile of each of the three projections.

    Activation (and, if needed, weight) tiles are cast to the MXU compute dtype
    in-kernel; accumulation and bias add are f32; epilogue casts to out dtype.
    """
    def proj(x_ref, w_ref, b_ref, o_ref):
        acc = jnp.dot(x_ref[...].astype(compute_dtype),
                      w_ref[...].astype(compute_dtype),
                      preferred_element_type=jnp.float32)
        o_ref[...] = (acc + b_ref[...].astype(jnp.float32)).astype(o_ref.dtype)

    proj(q_ref, wq_ref, bq_ref, qo_ref)
    proj(k_ref, wk_ref, bk_ref, ko_ref)
    proj(v_ref, wv_ref, bv_ref, vo_ref)


def _nbytes(shape, dtype):
    return math.prod(shape) * jnp.dtype(dtype).itemsize


def _vmem_capacity_bytes():
    try:
        return int(pltpu.get_tpu_info().vmem_capacity_bytes)
    except Exception:
        return 64 * 2 ** 20  # conservative (v7x-sized) fallback


def _footprint_bytes(tm, tn, E, act_dtypes, w_dtypes, b_dtypes, out_dtype, w_bufs):
    act = sum(2 * _nbytes((tm, E), dt) for dt in act_dtypes)     # double-buffered
    out = 3 * 2 * _nbytes((tm, tn), out_dtype)                   # double-buffered
    wgt = sum(w_bufs * _nbytes((E, tn), dt) for dt in w_dtypes)
    bia = sum(w_bufs * _nbytes((8, tn), dt) for dt in b_dtypes)  # sublane-padded
    return act + out + wgt + bia


def qkv_projection(query, key, value, wq, wk, wv, bq, bk, bv,
                   *, block_m=None, block_n=None, use_bf16=True, out_dtype=None):
    """query/key/value: [B, S, E]; w*: [E, D] (pre-transposed); b*: [D].

    Returns (Q, K, V): [B, S, D] in `out_dtype` (default: query.dtype).
    For best performance pre-cast the weights to bf16 once at init; activation
    tiles are cast in-kernel, so this wrapper issues no extra HBM passes.
    """
    B, S, E = query.shape
    D = wq.shape[1]
    M = B * S
    assert key.shape == (B, S, E) and value.shape == (B, S, E)
    assert wq.shape == (E, D) and wk.shape == (E, D) and wv.shape == (E, D)
    assert bq.shape == (D,) and bk.shape == (D,) and bv.shape == (D,)

    out_dtype = jnp.dtype(query.dtype) if out_dtype is None else jnp.dtype(out_dtype)
    if use_bf16:
        compute_dtype = jnp.bfloat16
    else:
        compute_dtype = jnp.promote_types(query.dtype, wq.dtype)

    # --- generation-aware VMEM budget --------------------------------------
    vmem_cap = _vmem_capacity_bytes()
    # <= ~48 MiB on v7x (64 MiB VMEM), <= ~96 MiB on v5e/v6e (128 MiB VMEM).
    vmem_budget = min(vmem_cap * 3 // 4, 100 * 2 ** 20)

    if block_m is None:
        block_m = 1024 if vmem_cap > 96 * 2 ** 20 else 512
    if block_n is None:
        block_n = 1024

    # --- tile selection ------------------------------------------------------
    if M <= block_m:
        # Split small M two ways so both v7x TensorCores get work.
        tm = M // 2 if (M >= 16 and M % 16 == 0) else M
    else:
        tm = block_m
    tn = D if D <= block_n else block_n

    act_dtypes = (query.dtype, key.dtype, value.dtype)
    w_dtypes = (wq.dtype, wk.dtype, wv.dtype)
    b_dtypes = (bq.dtype, bk.dtype, bv.dtype)

    def w_buf_count(tn_):
        return 1 if pl.cdiv(D, tn_) == 1 else 2

    # Shrink tiles until the pipelined footprint fits the VMEM budget.
    # Lane dims stay multiples of 128 (or full-extent); sublane dims stay
    # multiples of 8 (or full-extent).
    while True:
        footprint = _footprint_bytes(tm, tn, E, act_dtypes, w_dtypes, b_dtypes,
                                     out_dtype, w_buf_count(tn))
        if footprint <= vmem_budget:
            break
        if tn > 128 and tn % 256 == 0:
            tn //= 2
        elif tm > 8 and tm % 16 == 0:
            tm //= 2
        else:
            break

    grid_m = pl.cdiv(M, tm)
    grid_n = pl.cdiv(D, tn)
    weights_resident = grid_n == 1

    # --- specs ---------------------------------------------------------------
    act_spec = pl.BlockSpec((tm, E), lambda i, j: (i, 0))
    out_spec = pl.BlockSpec((tm, tn), lambda i, j: (i, j))
    if weights_resident:
        # Constant block index across the whole grid: a single buffer suffices
        # (no revolving), halving the dominant VMEM term.
        w_spec = pl.BlockSpec((E, tn), lambda i, j: (0, j),
                              pipeline_mode=pl.Buffered(1))
        b_spec = pl.BlockSpec((1, tn), lambda i, j: (0, j),
                              pipeline_mode=pl.Buffered(1))
    else:
        w_spec = pl.BlockSpec((E, tn), lambda i, j: (0, j))
        b_spec = pl.BlockSpec((1, tn), lambda i, j: (0, j))

    # Reshapes below are metadata-only (contiguous collapse / expand); no casts.
    q2 = query.reshape(M, E)
    k2 = key.reshape(M, E)
    v2 = value.reshape(M, E)
    bq2 = bq.reshape(1, D)
    bk2 = bk.reshape(1, D)
    bv2 = bv.reshape(1, D)

    vmem_limit = int(min(vmem_budget, max(32 * 2 ** 20, footprint * 2)))

    cost = pl.CostEstimate(
        flops=2 * M * E * D * 3,
        transcendentals=0,
        bytes_accessed=(sum(_nbytes((M, E), dt) for dt in act_dtypes)
                        + grid_m * sum(_nbytes((E, D), dt) for dt in w_dtypes)
                        + sum(_nbytes((1, D), dt) for dt in b_dtypes)
                        + 3 * _nbytes((M, D), out_dtype)),
    )

    kernel = functools.partial(_qkv_kernel, compute_dtype=compute_dtype)

    Q, K, V = pl.pallas_call(
        kernel,
        out_shape=(jax.ShapeDtypeStruct((M, D), out_dtype),
                   jax.ShapeDtypeStruct((M, D), out_dtype),
                   jax.ShapeDtypeStruct((M, D), out_dtype)),
        grid=(grid_m, grid_n),
        in_specs=[act_spec, act_spec, act_spec,
                  w_spec, w_spec, w_spec,
                  b_spec, b_spec, b_spec],
        out_specs=(out_spec, out_spec, out_spec),
        compiler_params=pltpu.CompilerParams(
            dimension_semantics=("parallel", "parallel"),
            vmem_limit_bytes=vmem_limit,
        ),
        cost_estimate=cost,
    )(q2, k2, v2, wq, wk, wv, bq2, bk2, bv2)

    return (Q.reshape(B, S, D), K.reshape(B, S, D), V.reshape(B, S, D))


def init_linear_params(key, in_dim, out_dim):
    """Deterministic init mimicking nn.Linear (uniform in +-1/sqrt(in_dim))."""
    kw, kb = jax.random.split(key)
    bound = 1.0 / (in_dim ** 0.5)
    # PyTorch weight is [out, in]; store transposed [in, out] for x @ W.
    w = jax.random.uniform(kw, (in_dim, out_dim), jnp.float32, -bound, bound)
    b = jax.random.uniform(kb, (out_dim,), jnp.float32, -bound, bound)
    return w, b


if __name__ == "__main__":
    # Small config: batch=2, seq=8, embed_dim=32, model_dim=32.
    B, S, E, D = 2, 8, 32, 32

    root = jax.random.PRNGKey(0)
    k_q, k_k, k_v, k_wq, k_wk, k_wv = jax.random.split(root, 6)

    query = jax.random.normal(k_q, (B, S, E), jnp.float32)
    key_in = jax.random.normal(k_k, (B, S, E), jnp.float32)
    value = jax.random.normal(k_v, (B, S, E), jnp.float32)

    wq, bq = init_linear_params(k_wq, E, D)
    wk, bk = init_linear_params(k_wk, E, D)
    wv, bv = init_linear_params(k_wv, E, D)

    # Weights are cast to the bf16 compute dtype ONCE at init (not per call).
    wq_c, wk_c, wv_c = (w.astype(jnp.bfloat16) for w in (wq, wk, wv))

    # Pure-JAX f32 reference.
    Q_ref = query @ wq + bq
    K_ref = key_in @ wk + bk
    V_ref = value @ wv + bv

    # Default fast path: bf16 MXU inputs, f32 accumulation, f32 outputs.
    Q, K, V = qkv_projection(query, key_in, value, wq_c, wk_c, wv_c, bq, bk, bv)
    jax.block_until_ready((Q, K, V))
    assert jnp.allclose(Q, Q_ref, atol=2e-2, rtol=2e-2), "Q mismatch (bf16 path)"
    assert jnp.allclose(K, K_ref, atol=2e-2, rtol=2e-2), "K mismatch (bf16 path)"
    assert jnp.allclose(V, V_ref, atol=2e-2, rtol=2e-2), "V mismatch (bf16 path)"

    # Full-precision path (use_bf16=False) against the f32 reference.
    Qf, Kf, Vf = qkv_projection(query, key_in, value, wq, wk, wv, bq, bk, bv,
                                use_bf16=False)
    jax.block_until_ready((Qf, Kf, Vf))
    assert jnp.allclose(Qf, Q_ref, atol=1e-5), "Q mismatch (f32 path)"
    assert jnp.allclose(Kf, K_ref, atol=1e-5), "K mismatch (f32 path)"
    assert jnp.allclose(Vf, V_ref, atol=1e-5), "V mismatch (f32 path)"

    print("KERNEL_OK")
</pallas_src>

<mosaic_0001>
module attributes {stable_mosaic.version = 11 : i64} {
  func.func @_qkv_kernel(%arg0: i32, %arg1: i32, %arg2: memref<8x32xf32, #tpu.memory_space<vmem>>, %arg3: memref<8x32xf32, #tpu.memory_space<vmem>>, %arg4: memref<8x32xf32, #tpu.memory_space<vmem>>, %arg5: memref<32x32xbf16, #tpu.memory_space<vmem>>, %arg6: memref<32x32xbf16, #tpu.memory_space<vmem>>, %arg7: memref<32x32xbf16, #tpu.memory_space<vmem>>, %arg8: memref<1x32xf32, #tpu.memory_space<vmem>>, %arg9: memref<1x32xf32, #tpu.memory_space<vmem>>, %arg10: memref<1x32xf32, #tpu.memory_space<vmem>>, %arg11: memref<8x32xf32, #tpu.memory_space<vmem>>, %arg12: memref<8x32xf32, #tpu.memory_space<vmem>>, %arg13: memref<8x32xf32, #tpu.memory_space<vmem>>) attributes {dimension_semantics = [#tpu.dimension_semantics<parallel>, #tpu.dimension_semantics<parallel>], iteration_bounds = array<i64: 2, 1>, scalar_prefetch = 0 : i64, scratch_operands = 0 : i64, tpu.core_type = #tpu.core_type<tc>, window_params = [{transform_indices = @transform_0, window_bounds = array<i64: 8, 32>}, {transform_indices = @transform_1, window_bounds = array<i64: 8, 32>}, {transform_indices = @transform_2, window_bounds = array<i64: 8, 32>}, {pipeline_mode = #tpu.pipeline_mode<synchronous>, transform_indices = @transform_3, window_bounds = array<i64: 32, 32>}, {pipeline_mode = #tpu.pipeline_mode<synchronous>, transform_indices = @transform_4, window_bounds = array<i64: 32, 32>}, {pipeline_mode = #tpu.pipeline_mode<synchronous>, transform_indices = @transform_5, window_bounds = array<i64: 32, 32>}, {pipeline_mode = #tpu.pipeline_mode<synchronous>, transform_indices = @transform_6, window_bounds = array<i64: 1, 32>}, {pipeline_mode = #tpu.pipeline_mode<synchronous>, transform_indices = @transform_7, window_bounds = array<i64: 1, 32>}, {pipeline_mode = #tpu.pipeline_mode<synchronous>, transform_indices = @transform_8, window_bounds = array<i64: 1, 32>}, {transform_indices = @transform_9, window_bounds = array<i64: 8, 32>}, {transform_indices = @transform_10, window_bounds = array<i64: 8, 32>}, {transform_indices = @transform_11, window_bounds = array<i64: 8, 32>}]} {
    %c0 = arith.constant 0 : index
    %c0_0 = arith.constant 0 : index
    %0 = vector.load %arg2[%c0, %c0_0] : memref<8x32xf32, #tpu.memory_space<vmem>>, vector<8x32xf32>
    %1 = arith.truncf %0 : vector<8x32xf32> to vector<8x32xbf16>
    %c0_1 = arith.constant 0 : index
    %c0_2 = arith.constant 0 : index
    %2 = vector.load %arg5[%c0_1, %c0_2] : memref<32x32xbf16, #tpu.memory_space<vmem>>, vector<32x32xbf16>
    %cst = arith.constant dense<0.000000e+00> : vector<8x32xf32>
    %3 = tpu.matmul %1, %2, %cst {dimension_numbers = #tpu.dot_dimension_numbers<[1], [0], [0], [1], [0, 0, 1, 1], [], []>} : vector<8x32xbf16>, vector<32x32xbf16>, vector<8x32xf32> -> vector<8x32xf32>
    %c0_3 = arith.constant 0 : index
    %c0_4 = arith.constant 0 : index
    %4 = vector.load %arg8[%c0_3, %c0_4] : memref<1x32xf32, #tpu.memory_space<vmem>>, vector<1x32xf32>
    %5 = vector.broadcast %4 : vector<1x32xf32> to vector<8x32xf32>
    %6 = arith.addf %3, %5 : vector<8x32xf32>
    %c0_5 = arith.constant 0 : index
    %c0_6 = arith.constant 0 : index
    %7 = vector.load %arg11[%c0_5, %c0_6] : memref<8x32xf32, #tpu.memory_space<vmem>>, vector<8x32xf32>
    tpu.vector_store %arg11[%c0_5, %c0_6], %6 {strides = array<i32>} : memref<8x32xf32, #tpu.memory_space<vmem>>, vector<8x32xf32>,
    %c0_7 = arith.constant 0 : index
    %c0_8 = arith.constant 0 : index
    %8 = vector.load %arg3[%c0_7, %c0_8] : memref<8x32xf32, #tpu.memory_space<vmem>>, vector<8x32xf32>
    %9 = arith.truncf %8 : vector<8x32xf32> to vector<8x32xbf16>
    %c0_9 = arith.constant 0 : index
    %c0_10 = arith.constant 0 : index
    %10 = vector.load %arg6[%c0_9, %c0_10] : memref<32x32xbf16, #tpu.memory_space<vmem>>, vector<32x32xbf16>
    %cst_11 = arith.constant dense<0.000000e+00> : vector<8x32xf32>
    %11 = tpu.matmul %9, %10, %cst_11 {dimension_numbers = #tpu.dot_dimension_numbers<[1], [0], [0], [1], [0, 0, 1, 1], [], []>} : vector<8x32xbf16>, vector<32x32xbf16>, vector<8x32xf32> -> vector<8x32xf32>
    %c0_12 = arith.constant 0 : index
    %c0_13 = arith.constant 0 : index
    %12 = vector.load %arg9[%c0_12, %c0_13] : memref<1x32xf32, #tpu.memory_space<vmem>>, vector<1x32xf32>
    %13 = vector.broadcast %12 : vector<1x32xf32> to vector<8x32xf32>
    %14 = arith.addf %11, %13 : vector<8x32xf32>
    %c0_14 = arith.constant 0 : index
    %c0_15 = arith.constant 0 : index
    %15 = vector.load %arg12[%c0_14, %c0_15] : memref<8x32xf32, #tpu.memory_space<vmem>>, vector<8x32xf32>
    tpu.vector_store %arg12[%c0_14, %c0_15], %14 {strides = array<i32>} : memref<8x32xf32, #tpu.memory_space<vmem>>, vector<8x32xf32>,
    %c0_16 = arith.constant 0 : index
    %c0_17 = arith.constant 0 : index
    %16 = vector.load %arg4[%c0_16, %c0_17] : memref<8x32xf32, #tpu.memory_space<vmem>>, vector<8x32xf32>
    %17 = arith.truncf %16 : vector<8x32xf32> to vector<8x32xbf16>
    %c0_18 = arith.constant 0 : index
    %c0_19 = arith.constant 0 : index
    %18 = vector.load %arg7[%c0_18, %c0_19] : memref<32x32xbf16, #tpu.memory_space<vmem>>, vector<32x32xbf16>
    %cst_20 = arith.constant dense<0.000000e+00> : vector<8x32xf32>
    %19 = tpu.matmul %17, %18, %cst_20 {dimension_numbers = #tpu.dot_dimension_numbers<[1], [0], [0], [1], [0, 0, 1, 1], [], []>} : vector<8x32xbf16>, vector<32x32xbf16>, vector<8x32xf32> -> vector<8x32xf32>
    %c0_21 = arith.constant 0 : index
    %c0_22 = arith.constant 0 : index
    %20 = vector.load %arg10[%c0_21, %c0_22] : memref<1x32xf32, #tpu.memory_space<vmem>>, vector<1x32xf32>
    %21 = vector.broadcast %20 : vector<1x32xf32> to vector<8x32xf32>
    %22 = arith.addf %19, %21 : vector<8x32xf32>
    %c0_23 = arith.constant 0 : index
    %c0_24 = arith.constant 0 : index
    %23 = vector.load %arg13[%c0_23, %c0_24] : memref<8x32xf32, #tpu.memory_space<vmem>>, vector<8x32xf32>
    tpu.vector_store %arg13[%c0_23, %c0_24], %22 {strides = array<i32>} : memref<8x32xf32, #tpu.memory_space<vmem>>, vector<8x32xf32>,
    return
  }
  func.func @transform_0(%arg0: i32, %arg1: i32) -> (i32, i32) {
    %c0_i32 = arith.constant 0 : i32
    %c0_i32_0 = arith.constant 0 : i32
    return %arg0, %c0_i32 : i32, i32
  }
  func.func @transform_1(%arg0: i32, %arg1: i32) -> (i32, i32) {
    %c0_i32 = arith.constant 0 : i32
    %c0_i32_0 = arith.constant 0 : i32
    return %arg0, %c0_i32 : i32, i32
  }
  func.func @transform_2(%arg0: i32, %arg1: i32) -> (i32, i32) {
    %c0_i32 = arith.constant 0 : i32
    %c0_i32_0 = arith.constant 0 : i32
    return %arg0, %c0_i32 : i32, i32
  }
  func.func @transform_3(%arg0: i32, %arg1: i32) -> (i32, i32) {
    %c0_i32 = arith.constant 0 : i32
    %c0_i32_0 = arith.constant 0 : i32
    return %c0_i32, %arg1 : i32, i32
  }
  func.func @transform_4(%arg0: i32, %arg1: i32) -> (i32, i32) {
    %c0_i32 = arith.constant 0 : i32
    %c0_i32_0 = arith.constant 0 : i32
    return %c0_i32, %arg1 : i32, i32
  }
  func.func @transform_5(%arg0: i32, %arg1: i32) -> (i32, i32) {
    %c0_i32 = arith.constant 0 : i32
    %c0_i32_0 = arith.constant 0 : i32
    return %c0_i32, %arg1 : i32, i32
  }
  func.func @transform_6(%arg0: i32, %arg1: i32) -> (i32, i32) {
    %c0_i32 = arith.constant 0 : i32
    %c0_i32_0 = arith.constant 0 : i32
    return %c0_i32, %arg1 : i32, i32
  }
  func.func @transform_7(%arg0: i32, %arg1: i32) -> (i32, i32) {
    %c0_i32 = arith.constant 0 : i32
    %c0_i32_0 = arith.constant 0 : i32
    return %c0_i32, %arg1 : i32, i32
  }
  func.func @transform_8(%arg0: i32, %arg1: i32) -> (i32, i32) {
    %c0_i32 = arith.constant 0 : i32
    %c0_i32_0 = arith.constant 0 : i32
    return %c0_i32, %arg1 : i32, i32
  }
  func.func @transform_9(%arg0: i32, %arg1: i32) -> (i32, i32) {
    %c0_i32 = arith.constant 0 : i32
    return %arg0, %arg1 : i32, i32
  }
  func.func @transform_10(%arg0: i32, %arg1: i32) -> (i32, i32) {
    %c0_i32 = arith.constant 0 : i32
    return %arg0, %arg1 : i32, i32
  }
  func.func @transform_11(%arg0: i32, %arg1: i32) -> (i32, i32) {
    %c0_i32 = arith.constant 0 : i32
    return %arg0, %arg1 : i32, i32
  }
}

</mosaic_0001>

<llo_original>
// kernel: tpu_custom_call.1
$region0: #{tpu_custom_call.1}
  #allocation0 [shape = 'u32[]', space=smem, size = 0x4, offset = 0x4, fixed_abs, tag = 'smem constant byte address 0x4 - core index']
  #allocation1 [shape = 'u32[144,128]{1,0:T(1,128)}', space=vmem, size = 0x12000, scoped, tag = 'internal scratch']
  %s0 = inlined_call_operand.hbm [shape: f32[16,32], index: 0, kind: input, shape index: {}]
  %s1 = inlined_call_operand.hbm [shape: f32[16,32], index: 1, kind: input, shape index: {}]
  %s2 = inlined_call_operand.hbm [shape: f32[16,32], index: 2, kind: input, shape index: {}]
  %s3 = inlined_call_operand.hbm [shape: bf16[32,32], index: 3, kind: input, shape index: {}]
  %s4 = inlined_call_operand.hbm [shape: bf16[32,32], index: 4, kind: input, shape index: {}]
  %s5 = inlined_call_operand.vmem [shape: bf16[32,32], index: 5, kind: input, shape index: {}]
  %s6 = inlined_call_operand.vmem [shape: f32[1,32], index: 6, kind: input, shape index: {}]
  %s7 = inlined_call_operand.vmem [shape: f32[1,32], index: 7, kind: input, shape index: {}]
  %s8 = inlined_call_operand.vmem [shape: f32[1,32], index: 8, kind: input, shape index: {}]
  %s9 = inlined_call_operand.hbm [shape: f32[16,32], index: 9, kind: output, shape index: {0}]
  %s10 = inlined_call_operand.hbm [shape: f32[16,32], index: 10, kind: output, shape index: {1}]
  %s11 = inlined_call_operand.hbm [shape: f32[16,32], index: 11, kind: output, shape index: {2}]
  %12 = xla_tuple %s9, %s10, %s11
  %s13 = sld [smem:[#allocation0]]
  $region105: #{tpu_custom_call.1} parent=0
    _
  %s15 = ssub.s32 1, %s13
  %s16 = scalar_select 0, %s15, %s13
  $region1: #{tpu_custom_call.1} parent=0
    #allocation2 [shape = 'u8[8192]{0}', space=vmem, size = 0x2000, scoped, tag = 'input window, operand 0']
    #allocation3 [shape = 's32[2]{0}', space=sflag, size = 0x8, scoped, tag = 'scoped memory for tpu_custom_call.1']
    #allocation4 [shape = 's32[2]{0}', space=sflag, size = 0x8, scoped, tag = 'scoped memory for tpu_custom_call.1']
    #allocation5 [shape = 'u8[8192]{0}', space=vmem, size = 0x2000, scoped, tag = 'input window, operand 1']
    #allocation6 [shape = 's32[2]{0}', space=sflag, size = 0x8, scoped, tag = 'scoped memory for tpu_custom_call.1']
    #allocation7 [shape = 'u8[8192]{0}', space=vmem, size = 0x2000, scoped, tag = 'input window, operand 2']
    #allocation8 [shape = 'u8[8192]{0}', space=vmem, size = 0x2000, scoped, tag = 'input window, operand 3, single buffered']
    #allocation9 [shape = 's32[1]{0}', space=sflag, size = 0x4, scoped, tag = 'scoped memory for tpu_custom_call.1']
    #allocation10 [shape = 'u8[8192]{0}', space=vmem, size = 0x2000, scoped, tag = 'input window, operand 4, single buffered']
    #allocation11 [shape = 'u8[8192]{0}', space=vmem, size = 0x2000, scoped, tag = 'output window, operand 0']
    #allocation12 [shape = 'u8[8192]{0}', space=vmem, size = 0x2000, scoped, tag = 'output window, operand 1']
    #allocation13 [shape = 's32[2]{0}', space=sflag, size = 0x8, scoped, tag = 'scoped memory for tpu_custom_call.1']
    #allocation14 [shape = 'u8[8192]{0}', space=vmem, size = 0x2000, scoped, tag = 'output window, operand 2']
    %17 = vsyncpa [#allocation3], 0
    %s18 = scalar_lea.sflag [#allocation3], 1
    %19 = vsyncpa %s18, 0
    %20 = vsyncpa [#allocation6], 0
    %s21 = scalar_lea.sflag [#allocation6], 1
    %22 = vsyncpa %s21, 0
    %23 = vsyncpa [#allocation9], 0
    %24 = vsyncpa [#allocation4], 0
    %s25 = scalar_lea.sflag [#allocation4], 1
    %26 = vsyncpa %s25, 0
    %27 = vsyncpa [#allocation13], 0
    %s28 = scalar_lea.sflag [#allocation13], 1
    %29 = vsyncpa %s28, 0
    loop: start=0, step=1, limit=4
    $region2: #{tpu_custom_call.1} parent=1 // loop_pre_header
      _
    $region3: #{tpu_custom_call.1} parent=1 // loop_header
      %s31 = sphi 0, %s35
      %p32 = scmp.ge.s32.totalorder %s31, 4
      %s38 = sphi 0, %s50
      %s39 = sphi 0, %s46
      %s40 = sphi 0, %s38
      %s41 = sphi 0, %s39
      %s42 = sphi 0, %s40
      %s43 = sphi 0, %s41
      %s53 = sphi 0, %s55
      %s56 = sphi 0, %s53
      %s57 = sphi 0, %s56
      %s73 = sphi 0, %s57
      %s79 = sphi 0, %s81
      %s82 = sphi 0, %s79
      %s83 = sphi 0, %s82
      %s99 = sphi 0, %s83
      %s105 = sphi 0, %s107
      %s108 = sphi 0, %s105
      %s109 = sphi 0, %s108
      %s125 = sphi 0, %s109
      %s131 = sphi 0, %s133
      %s134 = sphi 0, %s131
      %s135 = sphi 0, %s134
      %s151 = sphi 0, %s135
      %s157 = sphi 0, %s159
      %s160 = sphi 0, %s157
      %s161 = sphi 0, %s160
      %s177 = sphi 0, %s161
      %s183 = sphi 0, %s185
      %s186 = sphi 0, %s183
      %s187 = sphi 0, %s186
      %s203 = sphi 0, %s187
      %s209 = sphi 0, %s211
      %s212 = sphi 0, %s209
      %s213 = sphi 0, %s212
      %s229 = sphi 0, %s213
      %s235 = sphi 0, %s237
      %s238 = sphi 0, %s235
      %s239 = sphi 0, %s238
      %s255 = sphi 0, %s239
      %s261 = sphi 0, %s263
      %s264 = sphi 0, %s261
      %s265 = sphi 0, %s264
      %s281 = sphi 0, %s265
      %s289 = sphi 0, %s291
      %s292 = sphi 0, %s289
      %s293 = sphi 0, %s292
      %s309 = sphi 0, %s293
      %s317 = sphi 0, %s319
      %s320 = sphi 0, %s317
      %s321 = sphi 0, %s320
      %s337 = sphi 0, %s321
      %s345 = sphi 0, %s347
      %s348 = sphi 0, %s345
      %s349 = sphi 0, %s348
      %s365 = sphi 0, %s349
    $region4: #{tpu_custom_call.1} parent=1 // loop_header_branch
      %34 = sbr.rel (%p32) target = $region8
    $region5: #{tpu_custom_call.1} parent=1 // loop_body
      %s36 = ssub.s32 %s31, 1
      %s37 = ssub.s32 %s31, 2
      %s44 = sadd.s32 1, %s39
      %p45 = scmp.ge.s32.totalorder %s44, 1
      %s46 = scalar_select %p45, 0, %s44
      %s47 = sadd.s32 1, %s38
      %s48 = scalar_select %p45, %s47, %s38
      %p49 = scmp.ge.s32.totalorder %s48, 2
      %s50 = scalar_select %p49, 0, %s48
      %s51 = ssub.s32 %s38, %s50
      %p52 = scmp.eq.s32.totalorder %s51, 0
      %s54 = sadd.s32 %s53, 1
      %s55 = scalar_select %p52, %s53, %s54
      %p58 = pneg %p52
      %p59 = scmp.eq.s32.totalorder %s31, 1
      %p60 = por %p58, %p59
      %p61 = scmp.ne.s32.totalorder %s53, %s56
      %p62 = scmp.eq.s32.totalorder %s31, 0
      %p63 = por %p61, %p62
      %p64 = scmp.ne.s32.totalorder %s53, %s56
      %p65 = scmp.eq.s32.totalorder %s36, 1
      %p66 = por %p64, %p65
      %p67 = scmp.ne.s32.totalorder %s56, %s57
      %p68 = scmp.eq.s32.totalorder %s36, 0
      %p69 = por %p67, %p68
      %p70 = scmp.ne.s32.totalorder %s56, %s57
      %p71 = scmp.eq.s32.totalorder %s37, 1
      %p72 = por %p70, %p71
      %p74 = scmp.ne.s32.totalorder %s57, %s73
      %p75 = scmp.eq.s32.totalorder %s37, 0
      %p76 = por %p74, %p75
      %s77 = ssub.s32 %s38, %s50
      %p78 = scmp.eq.s32.totalorder %s77, 0
      %s80 = sadd.s32 %s79, 1
      %s81 = scalar_select %p78, %s79, %s80
      %p84 = pneg %p78
      %p85 = scmp.eq.s32.totalorder %s31, 1
      %p86 = por %p84, %p85
      %p87 = scmp.ne.s32.totalorder %s79, %s82
      %p88 = scmp.eq.s32.totalorder %s31, 0
      %p89 = por %p87, %p88
      %p90 = scmp.ne.s32.totalorder %s79, %s82
      %p91 = scmp.eq.s32.totalorder %s36, 1
      %p92 = por %p90, %p91
      %p93 = scmp.ne.s32.totalorder %s82, %s83
      %p94 = scmp.eq.s32.totalorder %s36, 0
      %p95 = por %p93, %p94
      %p96 = scmp.ne.s32.totalorder %s82, %s83
      %p97 = scmp.eq.s32.totalorder %s37, 1
      %p98 = por %p96, %p97
      %p100 = scmp.ne.s32.totalorder %s83, %s99
      %p101 = scmp.eq.s32.totalorder %s37, 0
      %p102 = por %p100, %p101
      %s103 = ssub.s32 %s38, %s50
      %p104 = scmp.eq.s32.totalorder %s103, 0
      %s106 = sadd.s32 %s105, 1
      %s107 = scalar_select %p104, %s105, %s106
      %p110 = pneg %p104
      %p111 = scmp.eq.s32.totalorder %s31, 1
      %p112 = por %p110, %p111
      %p113 = scmp.ne.s32.totalorder %s105, %s108
      %p114 = scmp.eq.s32.totalorder %s31, 0
      %p115 = por %p113, %p114
      %p116 = scmp.ne.s32.totalorder %s105, %s108
      %p117 = scmp.eq.s32.totalorder %s36, 1
      %p118 = por %p116, %p117
      %p119 = scmp.ne.s32.totalorder %s108, %s109
      %p120 = scmp.eq.s32.totalorder %s36, 0
      %p121 = por %p119, %p120
      %p122 = scmp.ne.s32.totalorder %s108, %s109
      %p123 = scmp.eq.s32.totalorder %s37, 1
      %p124 = por %p122, %p123
      %p126 = scmp.ne.s32.totalorder %s109, %s125
      %p127 = scmp.eq.s32.totalorder %s37, 0
      %p128 = por %p126, %p127
      %s129 = ssub.s32 %s39, %s46
      %p130 = scmp.eq.s32.totalorder %s129, 0
      %s132 = sadd.s32 %s131, 1
      %s133 = scalar_select %p130, %s131, %s132
      %p136 = pneg %p130
      %p137 = scmp.eq.s32.totalorder %s31, 1
      %p138 = por %p136, %p137
      %p139 = scmp.ne.s32.totalorder %s131, %s134
      %p140 = scmp.eq.s32.totalorder %s31, 0
      %p141 = por %p139, %p140
      %p142 = scmp.ne.s32.totalorder %s131, %s134
      %p143 = scmp.eq.s32.totalorder %s36, 1
      %p144 = por %p142, %p143
      %p145 = scmp.ne.s32.totalorder %s134, %s135
      %p146 = scmp.eq.s32.totalorder %s36, 0
      %p147 = por %p145, %p146
      %p148 = scmp.ne.s32.totalorder %s134, %s135
      %p149 = scmp.eq.s32.totalorder %s37, 1
      %p150 = por %p148, %p149
      %p152 = scmp.ne.s32.totalorder %s135, %s151
      %p153 = scmp.eq.s32.totalorder %s37, 0
      %p154 = por %p152, %p153
      %s155 = ssub.s32 %s39, %s46
      %p156 = scmp.eq.s32.totalorder %s155, 0
      %s158 = sadd.s32 %s157, 1
      %s159 = scalar_select %p156, %s157, %s158
      %p162 = pneg %p156
      %p163 = scmp.eq.s32.totalorder %s31, 1
      %p164 = por %p162, %p163
      %p165 = scmp.ne.s32.totalorder %s157, %s160
      %p166 = scmp.eq.s32.totalorder %s31, 0
      %p167 = por %p165, %p166
      %p168 = scmp.ne.s32.totalorder %s157, %s160
      %p169 = scmp.eq.s32.totalorder %s36, 1
      %p170 = por %p168, %p169
      %p171 = scmp.ne.s32.totalorder %s160, %s161
      %p172 = scmp.eq.s32.totalorder %s36, 0
      %p173 = por %p171, %p172
      %p174 = scmp.ne.s32.totalorder %s160, %s161
      %p175 = scmp.eq.s32.totalorder %s37, 1
      %p176 = por %p174, %p175
      %p178 = scmp.ne.s32.totalorder %s161, %s177
      %p179 = scmp.eq.s32.totalorder %s37, 0
      %p180 = por %p178, %p179
      %s181 = ssub.s32 %s39, %s46
      %p182 = scmp.eq.s32.totalorder %s181, 0
      %s184 = sadd.s32 %s183, 1
      %s185 = scalar_select %p182, %s183, %s184
      %p188 = pneg %p182
      %p189 = scmp.eq.s32.totalorder %s31, 1
      %p190 = por %p188, %p189
      %p191 = scmp.ne.s32.totalorder %s183, %s186
      %p192 = scmp.eq.s32.totalorder %s31, 0
      %p193 = por %p191, %p192
      %p194 = scmp.ne.s32.totalorder %s183, %s186
      %p195 = scmp.eq.s32.totalorder %s36, 1
      %p196 = por %p194, %p195
      %p197 = scmp.ne.s32.totalorder %s186, %s187
      %p198 = scmp.eq.s32.totalorder %s36, 0
      %p199 = por %p197, %p198
      %p200 = scmp.ne.s32.totalorder %s186, %s187
      %p201 = scmp.eq.s32.totalorder %s37, 1
      %p202 = por %p200, %p201
      %p204 = scmp.ne.s32.totalorder %s187, %s203
      %p205 = scmp.eq.s32.totalorder %s37, 0
      %p206 = por %p204, %p205
      %s207 = ssub.s32 %s39, %s46
      %p208 = scmp.eq.s32.totalorder %s207, 0
      %s210 = sadd.s32 %s209, 1
      %s211 = scalar_select %p208, %s209, %s210
      %p214 = pneg %p208
      %p215 = scmp.eq.s32.totalorder %s31, 1
      %p216 = por %p214, %p215
      %p217 = scmp.ne.s32.totalorder %s209, %s212
      %p218 = scmp.eq.s32.totalorder %s31, 0
      %p219 = por %p217, %p218
      %p220 = scmp.ne.s32.totalorder %s209, %s212
      %p221 = scmp.eq.s32.totalorder %s36, 1
      %p222 = por %p220, %p221
      %p223 = scmp.ne.s32.totalorder %s212, %s213
      %p224 = scmp.eq.s32.totalorder %s36, 0
      %p225 = por %p223, %p224
      %p226 = scmp.ne.s32.totalorder %s212, %s213
      %p227 = scmp.eq.s32.totalorder %s37, 1
      %p228 = por %p226, %p227
      %p230 = scmp.ne.s32.totalorder %s213, %s229
      %p231 = scmp.eq.s32.totalorder %s37, 0
      %p232 = por %p230, %p231
      %s233 = ssub.s32 %s39, %s46
      %p234 = scmp.eq.s32.totalorder %s233, 0
      %s236 = sadd.s32 %s235, 1
      %s237 = scalar_select %p234, %s235, %s236
      %p240 = pneg %p234
      %p241 = scmp.eq.s32.totalorder %s31, 1
      %p242 = por %p240, %p241
      %p243 = scmp.ne.s32.totalorder %s235, %s238
      %p244 = scmp.eq.s32.totalorder %s31, 0
      %p245 = por %p243, %p244
      %p246 = scmp.ne.s32.totalorder %s235, %s238
      %p247 = scmp.eq.s32.totalorder %s36, 1
      %p248 = por %p246, %p247
      %p249 = scmp.ne.s32.totalorder %s238, %s239
      %p250 = scmp.eq.s32.totalorder %s36, 0
      %p251 = por %p249, %p250
      %p252 = scmp.ne.s32.totalorder %s238, %s239
      %p253 = scmp.eq.s32.totalorder %s37, 1
      %p254 = por %p252, %p253
      %p256 = scmp.ne.s32.totalorder %s239, %s255
      %p257 = scmp.eq.s32.totalorder %s37, 0
      %p258 = por %p256, %p257
      %s259 = ssub.s32 %s39, %s46
      %p260 = scmp.eq.s32.totalorder %s259, 0
      %s262 = sadd.s32 %s261, 1
      %s263 = scalar_select %p260, %s261, %s262
      %p266 = pneg %p260
      %p267 = scmp.eq.s32.totalorder %s31, 1
      %p268 = por %p266, %p267
      %p269 = scmp.ne.s32.totalorder %s261, %s264
      %p270 = scmp.eq.s32.totalorder %s31, 0
      %p271 = por %p269, %p270
      %p272 = scmp.ne.s32.totalorder %s261, %s264
      %p273 = scmp.eq.s32.totalorder %s36, 1
      %p274 = por %p272, %p273
      %p275 = scmp.ne.s32.totalorder %s264, %s265
      %p276 = scmp.eq.s32.totalorder %s36, 0
      %p277 = por %p275, %p276
      %p278 = scmp.ne.s32.totalorder %s264, %s265
      %p279 = scmp.eq.s32.totalorder %s37, 1
      %p280 = por %p278, %p279
      %p282 = scmp.ne.s32.totalorder %s265, %s281
      %p283 = scmp.eq.s32.totalorder %s37, 0
      %p284 = por %p282, %p283
      %s285 = ssub.s32 %s38, %s50
      %s286 = ssub.s32 %s39, %s46
      %s287 = sor.u32 %s285, %s286
      %p288 = scmp.eq.s32.totalorder %s287, 0
      %s290 = sadd.s32 %s289, 1
      %s291 = scalar_select %p288, %s289, %s290
      %p294 = pneg %p288
      %p295 = scmp.eq.s32.totalorder %s31, 1
      %p296 = por %p294, %p295
      %p297 = scmp.ne.s32.totalorder %s289, %s292
      %p298 = scmp.eq.s32.totalorder %s31, 0
      %p299 = por %p297, %p298
      %p300 = scmp.ne.s32.totalorder %s289, %s292
      %p301 = scmp.eq.s32.totalorder %s36, 1
      %p302 = por %p300, %p301
      %p303 = scmp.ne.s32.totalorder %s292, %s293
      %p304 = scmp.eq.s32.totalorder %s36, 0
      %p305 = por %p303, %p304
      %p306 = scmp.ne.s32.totalorder %s292, %s293
      %p307 = scmp.eq.s32.totalorder %s37, 1
      %p308 = por %p306, %p307
      %p310 = scmp.ne.s32.totalorder %s293, %s309
      %p311 = scmp.eq.s32.totalorder %s37, 0
      %p312 = por %p310, %p311
      %s313 = ssub.s32 %s38, %s50
      %s314 = ssub.s32 %s39, %s46
      %s315 = sor.u32 %s313, %s314
      %p316 = scmp.eq.s32.totalorder %s315, 0
      %s318 = sadd.s32 %s317, 1
      %s319 = scalar_select %p316, %s317, %s318
      %p322 = pneg %p316
      %p323 = scmp.eq.s32.totalorder %s31, 1
      %p324 = por %p322, %p323
      %p325 = scmp.ne.s32.totalorder %s317, %s320
      %p326 = scmp.eq.s32.totalorder %s31, 0
      %p327 = por %p325, %p326
      %p328 = scmp.ne.s32.totalorder %s317, %s320
      %p329 = scmp.eq.s32.totalorder %s36, 1
      %p330 = por %p328, %p329
      %p331 = scmp.ne.s32.totalorder %s320, %s321
      %p332 = scmp.eq.s32.totalorder %s36, 0
      %p333 = por %p331, %p332
      %p334 = scmp.ne.s32.totalorder %s320, %s321
      %p335 = scmp.eq.s32.totalorder %s37, 1
      %p336 = por %p334, %p335
      %p338 = scmp.ne.s32.totalorder %s321, %s337
      %p339 = scmp.eq.s32.totalorder %s37, 0
      %p340 = por %p338, %p339
      %s341 = ssub.s32 %s38, %s50
      %s342 = ssub.s32 %s39, %s46
      %s343 = sor.u32 %s341, %s342
      %p344 = scmp.eq.s32.totalorder %s343, 0
      %s346 = sadd.s32 %s345, 1
      %s347 = scalar_select %p344, %s345, %s346
      %p350 = pneg %p344
      %p351 = scmp.eq.s32.totalorder %s31, 1
      %p352 = por %p350, %p351
      %p353 = scmp.ne.s32.totalorder %s345, %s348
      %p354 = scmp.eq.s32.totalorder %s31, 0
      %p355 = por %p353, %p354
      %p356 = scmp.ne.s32.totalorder %s345, %s348
      %p357 = scmp.eq.s32.totalorder %s36, 1
      %p358 = por %p356, %p357
      %p359 = scmp.ne.s32.totalorder %s348, %s349
      %p360 = scmp.eq.s32.totalorder %s36, 0
      %p361 = por %p359, %p360
      %p362 = scmp.ne.s32.totalorder %s348, %s349
      %p363 = scmp.eq.s32.totalorder %s37, 1
      %p364 = por %p362, %p363
      %p366 = scmp.ne.s32.totalorder %s349, %s365
      %p367 = scmp.eq.s32.totalorder %s37, 0
      %p368 = por %p366, %p367
      %p369 = scmp.le.s32.totalorder 1, %s31
      %p370 = scmp.lt.s32.totalorder %s31, 3
      %p371 = pnand %p369, %p370
      %p372 = pneg %p371
      // Predicated region
      $region9: #{tpu_custom_call.1} parent=5 // pred_check
        _
      $region10: #{tpu_custom_call.1} parent=5 // pred_check_branch
        %374 = sbr.rel (%p371) target = $region12
      $region11: #{tpu_custom_call.1} parent=5 // pred_region
        %s375 = ssub.s32 %s31, 1
        // Predicated region
        $region13: #{tpu_custom_call.1} parent=11 // pred_check
          %p376 = pneg %p147
        $region14: #{tpu_custom_call.1} parent=11 // pred_check_branch
          %378 = sbr.rel (%p376) target = $region16
        $region15: #{tpu_custom_call.1} parent=11 // pred_region
          %s380 = ssub.s32 256, 256
          %381 = vsyncadd [#allocation9], %s380
          %s382 = smul.addr %s41, 64
          %s383 = scalar_lea.hbm %s3, %s382
          %s384 = sshll.u32 [#allocation8], 4
          %s385 = int_to_ptr.vmem [resolvable:$true] %s384
          %390 = dma.hbm_to_vmem [thread:$0]  %s383, 256, %s385, [#allocation9], 64, 64, 4
        $region16: #{tpu_custom_call.1} parent=11 // pred_fallthru
          _
        // Predicated region
        $region17: #{tpu_custom_call.1} parent=11 // pred_check
          %p391 = pneg %p173
        $region18: #{tpu_custom_call.1} parent=11 // pred_check_branch
          %393 = sbr.rel (%p391) target = $region20
        $region19: #{tpu_custom_call.1} parent=11 // pred_region
          %s395 = ssub.s32 256, 256
          %396 = vsyncadd [#allocation9], %s395
          %s397 = smul.addr %s41, 64
          %s398 = scalar_lea.hbm %s4, %s397
          %s399 = sshll.u32 [#allocation10], 4
          %s400 = int_to_ptr.vmem [resolvable:$true] %s399
          %405 = dma.hbm_to_vmem [thread:$0]  %s398, 256, %s400, [#allocation9], 64, 64, 4
        $region20: #{tpu_custom_call.1} parent=11 // pred_fallthru
          _
        // Predicated region
        $region21: #{tpu_custom_call.1} parent=11 // pred_check
          %p406 = pneg %p199
        $region22: #{tpu_custom_call.1} parent=11 // pred_check_branch
          %408 = sbr.rel (%p406) target = $region24
        $region23: #{tpu_custom_call.1} parent=11 // pred_region
          %p409 = scmp.lt.s32.totalorder %s41, 0
          %s410 = scalar_select %p409, %s41, 0
          %s411 = smul.addr %s410, 4
          %s412 = scalar_lea.vmem %s5, %s411
        $region24: #{tpu_custom_call.1} parent=11 // pred_fallthru
          _
        // Predicated region
        $region25: #{tpu_custom_call.1} parent=11 // pred_check
          %p413 = pneg %p225
        $region26: #{tpu_custom_call.1} parent=11 // pred_check_branch
          %415 = sbr.rel (%p413) target = $region28
        $region27: #{tpu_custom_call.1} parent=11 // pred_region
          %p416 = scmp.lt.s32.totalorder %s41, 0
          %s417 = scalar_select %p416, %s41, 0
          %s418 = scalar_lea.vmem %s6, %s417
        $region28: #{tpu_custom_call.1} parent=11 // pred_fallthru
          _
        // Predicated region
        $region29: #{tpu_custom_call.1} parent=11 // pred_check
          %p419 = pneg %p251
        $region30: #{tpu_custom_call.1} parent=11 // pred_check_branch
          %421 = sbr.rel (%p419) target = $region32
        $region31: #{tpu_custom_call.1} parent=11 // pred_region
          %p422 = scmp.lt.s32.totalorder %s41, 0
          %s423 = scalar_select %p422, %s41, 0
          %s424 = scalar_lea.vmem %s7, %s423
        $region32: #{tpu_custom_call.1} parent=11 // pred_fallthru
          _
        // Predicated region
        $region33: #{tpu_custom_call.1} parent=11 // pred_check
          %p425 = pneg %p277
        $region34: #{tpu_custom_call.1} parent=11 // pred_check_branch
          %427 = sbr.rel (%p425) target = $region36
        $region35: #{tpu_custom_call.1} parent=11 // pred_region
          %p428 = scmp.lt.s32.totalorder %s41, 0
          %s429 = scalar_select %p428, %s41, 0
          %s430 = scalar_lea.vmem %s8, %s429
        $region36: #{tpu_custom_call.1} parent=11 // pred_fallthru
          _
      $region12: #{tpu_custom_call.1} parent=5 // pred_fallthru
        _
      %p431 = scmp.lt.s32.totalorder %s31, 2
      // Predicated region
      $region37: #{tpu_custom_call.1} parent=5 // pred_check
        %p432 = pneg %p431
      $region38: #{tpu_custom_call.1} parent=5 // pred_check_branch
        %434 = sbr.rel (%p432) target = $region40
      $region39: #{tpu_custom_call.1} parent=5 // pred_region
        // Predicated region
        $region41: #{tpu_custom_call.1} parent=39 // pred_check
          %p435 = pneg %p63
        $region42: #{tpu_custom_call.1} parent=39 // pred_check_branch
          %437 = sbr.rel (%p435) target = $region44
        $region43: #{tpu_custom_call.1} parent=39 // pred_region
          %s438 = sand.u32 %s53, 1
          %s439 = scalar_lea.sflag [#allocation3], %s438
          %s440 = sand.u32 %s53, 1
          %s441 = smul.addr %s440, 8
          %s442 = scalar_lea.vmem [#allocation2], %s441
          %s444 = ssub.s32 128, 128
          %445 = vsyncadd %s439, %s444
          %s446 = smul.addr %s38, 128
          %s447 = scalar_lea.hbm %s0, %s446
          %s449 = sshll.u32 %s442, 4
          %s450 = int_to_ptr.vmem [resolvable:$true] %s449
          %452 = dma.hbm_to_vmem [thread:$0]  %s447, 128, %s450, %s439
        $region44: #{tpu_custom_call.1} parent=39 // pred_fallthru
          _
        // Predicated region
        $region45: #{tpu_custom_call.1} parent=39 // pred_check
          %p453 = pneg %p89
        $region46: #{tpu_custom_call.1} parent=39 // pred_check_branch
          %455 = sbr.rel (%p453) target = $region48
        $region47: #{tpu_custom_call.1} parent=39 // pred_region
          %s456 = sand.u32 %s31, 1
          %s457 = scalar_lea.sflag [#allocation6], %s456
          %s458 = sand.u32 %s79, 1
          %s459 = smul.addr %s458, 8
          %s460 = scalar_lea.vmem [#allocation5], %s459
          %s462 = ssub.s32 128, 128
          %463 = vsyncadd %s457, %s462
          %s464 = smul.addr %s38, 128
          %s465 = scalar_lea.hbm %s1, %s464
          %s467 = sshll.u32 %s460, 4
          %s468 = int_to_ptr.vmem [resolvable:$true] %s467
          %470 = dma.hbm_to_vmem [thread:$0]  %s465, 128, %s468, %s457
        $region48: #{tpu_custom_call.1} parent=39 // pred_fallthru
          _
        // Predicated region
        $region49: #{tpu_custom_call.1} parent=39 // pred_check
          %p471 = pneg %p115
        $region50: #{tpu_custom_call.1} parent=39 // pred_check_branch
          %473 = sbr.rel (%p471) target = $region52
        $region51: #{tpu_custom_call.1} parent=39 // pred_region
          %s474 = sand.u32 %s31, 1
          %s475 = scalar_lea.sflag [#allocation6], %s474
          %s476 = sand.u32 %s105, 1
          %s477 = smul.addr %s476, 8
          %s478 = scalar_lea.vmem [#allocation7], %s477
          %s480 = ssub.s32 128, 128
          %481 = vsyncadd %s475, %s480
          %s482 = smul.addr %s38, 128
          %s483 = scalar_lea.hbm %s2, %s482
          %s485 = sshll.u32 %s478, 4
          %s486 = int_to_ptr.vmem [resolvable:$true] %s485
          %488 = dma.hbm_to_vmem [thread:$0]  %s483, 128, %s486, %s475
        $region52: #{tpu_custom_call.1} parent=39 // pred_fallthru
          _
      $region40: #{tpu_custom_call.1} parent=5 // pred_fallthru
        _
      %p489 = scmp.le.s32.totalorder 1, %s31
      %p490 = scmp.lt.s32.totalorder %s31, 3
      %p491 = pnand %p489, %p490
      %p492 = pneg %p491
      // Predicated region
      $region53: #{tpu_custom_call.1} parent=5 // pred_check
        _
      $region54: #{tpu_custom_call.1} parent=5 // pred_check_branch
        %494 = sbr.rel (%p491) target = $region56
      $region55: #{tpu_custom_call.1} parent=5 // pred_region
        %s495 = ssub.s32 %s31, 1
        %s496 = sand.u32 %s56, 1
        %s497 = scalar_lea.sflag [#allocation3], %s496
        %s498 = sand.u32 %s56, 1
        %s499 = smul.addr %s498, 8
        %s500 = scalar_lea.vmem [#allocation2], %s499
        // Predicated region
        $region57: #{tpu_custom_call.1} parent=55 // pred_check
          %p501 = pneg %p69
        $region58: #{tpu_custom_call.1} parent=55 // pred_check_branch
          %503 = sbr.rel (%p501) target = $region60
        $region59: #{tpu_custom_call.1} parent=55 // pred_region
          %504 = dma.done %s497, 128
        $region60: #{tpu_custom_call.1} parent=55 // pred_fallthru
          _
        %s505 = sand.u32 %s36, 1
        %s506 = scalar_lea.sflag [#allocation6], %s505
        %s507 = sand.u32 %s82, 1
        %s508 = smul.addr %s507, 8
        %s509 = scalar_lea.vmem [#allocation5], %s508
        // Predicated region
        $region61: #{tpu_custom_call.1} parent=55 // pred_check
          %p510 = pneg %p95
        $region62: #{tpu_custom_call.1} parent=55 // pred_check_branch
          %512 = sbr.rel (%p510) target = $region64
        $region63: #{tpu_custom_call.1} parent=55 // pred_region
          %513 = dma.done %s506, 128
        $region64: #{tpu_custom_call.1} parent=55 // pred_fallthru
          _
        %s514 = sand.u32 %s36, 1
        %s515 = scalar_lea.sflag [#allocation6], %s514
        %s516 = sand.u32 %s108, 1
        %s517 = smul.addr %s516, 8
        %s518 = scalar_lea.vmem [#allocation7], %s517
        // Predicated region
        $region65: #{tpu_custom_call.1} parent=55 // pred_check
          %p519 = pneg %p121
        $region66: #{tpu_custom_call.1} parent=55 // pred_check_branch
          %521 = sbr.rel (%p519) target = $region68
        $region67: #{tpu_custom_call.1} parent=55 // pred_region
          %522 = dma.done %s515, 128
        $region68: #{tpu_custom_call.1} parent=55 // pred_fallthru
          _
        // Predicated region
        $region69: #{tpu_custom_call.1} parent=55 // pred_check
          %p523 = pneg %p147
        $region70: #{tpu_custom_call.1} parent=55 // pred_check_branch
          %525 = sbr.rel (%p523) target = $region72
        $region71: #{tpu_custom_call.1} parent=55 // pred_region
          %526 = dma.done [#allocation9], 256
        $region72: #{tpu_custom_call.1} parent=55 // pred_fallthru
          _
        // Predicated region
        $region73: #{tpu_custom_call.1} parent=55 // pred_check
          %p527 = pneg %p173
        $region74: #{tpu_custom_call.1} parent=55 // pred_check_branch
          %529 = sbr.rel (%p527) target = $region76
        $region75: #{tpu_custom_call.1} parent=55 // pred_region
          %530 = dma.done [#allocation9], 256
        $region76: #{tpu_custom_call.1} parent=55 // pred_fallthru
          _
        %s531 = sand.u32 %s56, 1
        %s532 = scalar_lea.sflag [#allocation3], %s531
        %s533 = sand.u32 %s56, 1
        %s534 = smul.addr %s533, 8
        %s535 = scalar_lea.vmem [#allocation2], %s534
        %p536 = pneg %p69
        %p537 = pneg %p66
        %s538 = sand.u32 %s36, 1
        %s539 = scalar_lea.sflag [#allocation6], %s538
        %s540 = sand.u32 %s82, 1
        %s541 = smul.addr %s540, 8
        %s542 = scalar_lea.vmem [#allocation5], %s541
        %p543 = pneg %p95
        %p544 = pneg %p92
        %s545 = sand.u32 %s36, 1
        %s546 = scalar_lea.sflag [#allocation6], %s545
        %s547 = sand.u32 %s108, 1
        %s548 = smul.addr %s547, 8
        %s549 = scalar_lea.vmem [#allocation7], %s548
        %p550 = pneg %p121
        %p551 = pneg %p118
        %p552 = pneg %p147
        %p553 = pneg %p144
        %p554 = pneg %p173
        %p555 = pneg %p170
        %p556 = scmp.lt.s32.totalorder %s41, 0
        %s557 = scalar_select %p556, %s41, 0
        %s558 = smul.addr %s557, 4
        %s559 = scalar_lea.vmem %s5, %s558
        %p560 = pneg %p199
        %p561 = pneg %p196
        %p562 = scmp.lt.s32.totalorder %s41, 0
        %s563 = scalar_select %p562, %s41, 0
        %s564 = scalar_lea.vmem %s6, %s563
        %p565 = pneg %p225
        %p566 = pneg %p222
        %p567 = scmp.lt.s32.totalorder %s41, 0
        %s568 = scalar_select %p567, %s41, 0
        %s569 = scalar_lea.vmem %s7, %s568
        %p570 = pneg %p251
        %p571 = pneg %p248
        %p572 = scmp.lt.s32.totalorder %s41, 0
        %s573 = scalar_select %p572, %s41, 0
        %s574 = scalar_lea.vmem %s8, %s573
        %p575 = pneg %p277
        %p576 = pneg %p274
        %p577 = pneg %p305
        %p578 = pneg %p302
        %s579 = sand.u32 %s292, 1
        %s580 = scalar_lea.sflag [#allocation4], %s579
        %s581 = sand.u32 %s292, 1
        %s582 = smul.addr %s581, 8
        %s583 = scalar_lea.vmem [#allocation11], %s582
        %p584 = pneg %p333
        %p585 = pneg %p330
        %s586 = sand.u32 %s36, 1
        %s587 = scalar_lea.sflag [#allocation13], %s586
        %s588 = sand.u32 %s320, 1
        %s589 = smul.addr %s588, 8
        %s590 = scalar_lea.vmem [#allocation12], %s589
        %p591 = pneg %p361
        %p592 = pneg %p358
        %s593 = sand.u32 %s36, 1
        %s594 = scalar_lea.sflag [#allocation13], %s593
        %s595 = sand.u32 %s348, 1
        %s596 = smul.addr %s595, 8
        %s597 = scalar_lea.vmem [#allocation14], %s596
        %p598 = scmp.lt.s32.totalorder %s41, 0
        %s599 = scalar_select %p598, %s41, 0
        %s600 = smul.addr %s599, 4
        %s601 = scalar_lea.vmem %s5, %s600
        %p602 = scmp.lt.s32.totalorder %s41, 0
        %s603 = scalar_select %p602, %s41, 0
        %s604 = scalar_lea.vmem %s6, %s603
        %p605 = scmp.lt.s32.totalorder %s41, 0
        %s606 = scalar_select %p605, %s41, 0
        %s607 = scalar_lea.vmem %s7, %s606
        %p608 = scmp.lt.s32.totalorder %s41, 0
        %s609 = scalar_select %p608, %s41, 0
        %s610 = scalar_lea.vmem %s8, %s609
        %v612 = vld [vmem:[%s500] sm:$0xff]
        %v613 = vpack.c.bf16 %v612, %v612
        %v614 = vld [vmem:[#allocation8] sm:$0xf]
        %v615 = vld [vmem:[#allocation8 + $0x4] sm:$0xf]
        %v616 = vld [vmem:[#allocation8 + $0x8] sm:$0xf]
        %v617 = vld [vmem:[#allocation8 + $0xc] sm:$0xf]
        %v618 = vld [vmem:[%s604] sm:$0x1]
        %v620 = vlaneseq
        %v621 = vshrl.u32 %v620, 7
        %v622 = vsub.s32 0, %v621
        %v623 = vrot.slane %v618, %v622
        %v629 = vunpack.c.l.b16 %v614
        %v630 = vunpack.c.l.b16 %v615
        %v631 = vunpack.c.l.b16 %v616
        %v632 = vunpack.c.l.b16 %v617
        %v633 = vpack.c.b16 %v630, %v629
        %v634 = vpack.c.b16 %v632, %v631
        %vm637 = vcmask 261120
        %v639 = vsel %vm637, %v613, 0
        %641 = vmatprep.subr.bf16.mxu0 0
        %642 = vmatpush1.bf16.msra.mxu0 %v633
        %643 = vmatprep.subr.bf16.mxu0 0
        %644 = vmatpush1.bf16.msra.mxu0 %v634
        %645 = vmatprep.subr.bf16.mxu0 0
        %646 = vmatpush1.bf16.msra.mxu0 0
        %647 = vmatprep.subr.bf16.mxu0 0
        %648 = vmatpush1.bf16.msra.mxu0 0
        %649 = vmatprep.subr.bf16.mxu0 0
        %650 = vmatpush1.bf16.msra.mxu0 0
        %651 = vmatprep.subr.bf16.mxu0 0
        %652 = vmatpush1.bf16.msra.mxu0 0
        %653 = vmatprep.subr.bf16.mxu0 0
        %654 = vmatpush1.bf16.msra.mxu0 0
        %655 = vmatprep.subr.bf16.mxu0 0
        %656 = vmatpush1.bf16.msra.mxu0 0
        %657 = vmatprep.subr.bf16.mxu0 0
        %658 = vmatpush1.bf16.msra.mxu0 0
        %659 = vmatprep.subr.bf16.mxu0 0
        %660 = vmatpush1.bf16.msra.mxu0 0
        %661 = vmatprep.subr.bf16.mxu0 0
        %662 = vmatpush1.bf16.msra.mxu0 0
        %663 = vmatprep.subr.bf16.mxu0 0
        %664 = vmatpush1.bf16.msra.mxu0 0
        %665 = vmatprep.subr.bf16.mxu0 0
        %666 = vmatpush1.bf16.msra.mxu0 0
        %667 = vmatprep.subr.bf16.mxu0 0
        %668 = vmatpush1.bf16.msra.mxu0 0
        %669 = vmatprep.subr.bf16.mxu0 0
        %670 = vmatpush1.bf16.msra.mxu0 0
        %671 = vmatprep.subr.bf16.mxu0 0
        %672 = vmatpush1.bf16.msra.mxu0 0
        %673 = vmatprep.mubr.bf16.mxu0 0
        %674 = vmatmul.mubr.bf16.gmra.mrb[0].mxu0 %v639
        %v675 = vpop.f32.mrb[0].mxu0
        %v676 = vadd.f32 %v623, %v675
        %v677 = vpop.f32.mrb[0].mxu0
        %v678 = vpop.f32.mrb[0].mxu0
        %v679 = vpop.f32.mrb[0].mxu0
        %680 = vdwg.mxu0
        %681 = vst.msk [vmem:[%s583] sm:$0xff] %vm637, %v676
        %v682 = vld [vmem:[%s509] sm:$0xff]
        %v683 = vpack.c.bf16 %v682, %v682
        %v684 = vld [vmem:[#allocation10] sm:$0xf]
        %v685 = vld [vmem:[#allocation10 + $0x4] sm:$0xf]
        %v686 = vld [vmem:[#allocation10 + $0x8] sm:$0xf]
        %v687 = vld [vmem:[#allocation10 + $0xc] sm:$0xf]
        %v688 = vld [vmem:[%s607] sm:$0x1]
        %v690 = vlaneseq
        %v691 = vshrl.u32 %v690, 7
        %v692 = vsub.s32 0, %v691
        %v693 = vrot.slane %v688, %v692
        %v699 = vunpack.c.l.b16 %v684
        %v700 = vunpack.c.l.b16 %v685
        %v701 = vunpack.c.l.b16 %v686
        %v702 = vunpack.c.l.b16 %v687
        %v703 = vpack.c.b16 %v700, %v699
        %v704 = vpack.c.b16 %v702, %v701
        %v708 = vsel %vm637, %v683, 0
        %710 = vmatprep.subr.bf16.mxu0 0
        %711 = vmatpush1.bf16.msra.mxu0 %v703
        %712 = vmatprep.subr.bf16.mxu0 0
        %713 = vmatpush1.bf16.msra.mxu0 %v704
        %714 = vmatprep.subr.bf16.mxu0 0
        %715 = vmatpush1.bf16.msra.mxu0 0
        %716 = vmatprep.subr.bf16.mxu0 0
        %717 = vmatpush1.bf16.msra.mxu0 0
        %718 = vmatprep.subr.bf16.mxu0 0
        %719 = vmatpush1.bf16.msra.mxu0 0
        %720 = vmatprep.subr.bf16.mxu0 0
        %721 = vmatpush1.bf16.msra.mxu0 0
        %722 = vmatprep.subr.bf16.mxu0 0
        %723 = vmatpush1.bf16.msra.mxu0 0
        %724 = vmatprep.subr.bf16.mxu0 0
        %725 = vmatpush1.bf16.msra.mxu0 0
        %726 = vmatprep.subr.bf16.mxu0 0
        %727 = vmatpush1.bf16.msra.mxu0 0
        %728 = vmatprep.subr.bf16.mxu0 0
        %729 = vmatpush1.bf16.msra.mxu0 0
        %730 = vmatprep.subr.bf16.mxu0 0
        %731 = vmatpush1.bf16.msra.mxu0 0
        %732 = vmatprep.subr.bf16.mxu0 0
        %733 = vmatpush1.bf16.msra.mxu0 0
        %734 = vmatprep.subr.bf16.mxu0 0
        %735 = vmatpush1.bf16.msra.mxu0 0
        %736 = vmatprep.subr.bf16.mxu0 0
        %737 = vmatpush1.bf16.msra.mxu0 0
        %738 = vmatprep.subr.bf16.mxu0 0
        %739 = vmatpush1.bf16.msra.mxu0 0
        %740 = vmatprep.subr.bf16.mxu0 0
        %741 = vmatpush1.bf16.msra.mxu0 0
        %742 = vmatprep.mubr.bf16.mxu0 0
        %743 = vmatmul.mubr.bf16.gmra.mrb[0].mxu0 %v708
        %v744 = vpop.f32.mrb[0].mxu0
        %v745 = vadd.f32 %v693, %v744
        %v746 = vpop.f32.mrb[0].mxu0
        %v747 = vpop.f32.mrb[0].mxu0
        %v748 = vpop.f32.mrb[0].mxu0
        %749 = vdwg.mxu0
        %750 = vst.msk [vmem:[%s590] sm:$0xff] %vm637, %v745
        %v751 = vld [vmem:[%s518] sm:$0xff]
        %v752 = vpack.c.bf16 %v751, %v751
        %v753 = vld [vmem:[%s601] sm:$0xf]
        %v754 = vld [vmem:[%s601 + $0x4] sm:$0xf]
        %v755 = vld [vmem:[%s601 + $0x8] sm:$0xf]
        %v756 = vld [vmem:[%s601 + $0xc] sm:$0xf]
        %v757 = vld [vmem:[%s610] sm:$0x1]
        %v759 = vlaneseq
        %v760 = vshrl.u32 %v759, 7
        %v761 = vsub.s32 0, %v760
        %v762 = vrot.slane %v757, %v761
        %v768 = vunpack.c.l.b16 %v753
        %v769 = vunpack.c.l.b16 %v754
        %v770 = vunpack.c.l.b16 %v755
        %v771 = vunpack.c.l.b16 %v756
        %v772 = vpack.c.b16 %v769, %v768
        %v773 = vpack.c.b16 %v771, %v770
        %v777 = vsel %vm637, %v752, 0
        %779 = vmatprep.subr.bf16.mxu0 0
        %780 = vmatpush1.bf16.msra.mxu0 %v772
        %781 = vmatprep.subr.bf16.mxu0 0
        %782 = vmatpush1.bf16.msra.mxu0 %v773
        %783 = vmatprep.subr.bf16.mxu0 0
        %784 = vmatpush1.bf16.msra.mxu0 0
        %785 = vmatprep.subr.bf16.mxu0 0
        %786 = vmatpush1.bf16.msra.mxu0 0
        %787 = vmatprep.subr.bf16.mxu0 0
        %788 = vmatpush1.bf16.msra.mxu0 0
        %789 = vmatprep.subr.bf16.mxu0 0
        %790 = vmatpush1.bf16.msra.mxu0 0
        %791 = vmatprep.subr.bf16.mxu0 0
        %792 = vmatpush1.bf16.msra.mxu0 0
        %793 = vmatprep.subr.bf16.mxu0 0
        %794 = vmatpush1.bf16.msra.mxu0 0
        %795 = vmatprep.subr.bf16.mxu0 0
        %796 = vmatpush1.bf16.msra.mxu0 0
        %797 = vmatprep.subr.bf16.mxu0 0
        %798 = vmatpush1.bf16.msra.mxu0 0
        %799 = vmatprep.subr.bf16.mxu0 0
        %800 = vmatpush1.bf16.msra.mxu0 0
        %801 = vmatprep.subr.bf16.mxu0 0
        %802 = vmatpush1.bf16.msra.mxu0 0
        %803 = vmatprep.subr.bf16.mxu0 0
        %804 = vmatpush1.bf16.msra.mxu0 0
        %805 = vmatprep.subr.bf16.mxu0 0
        %806 = vmatpush1.bf16.msra.mxu0 0
        %807 = vmatprep.subr.bf16.mxu0 0
        %808 = vmatpush1.bf16.msra.mxu0 0
        %809 = vmatprep.subr.bf16.mxu0 0
        %810 = vmatpush1.bf16.msra.mxu0 0
        %811 = vmatprep.mubr.bf16.mxu0 0
        %812 = vmatmul.mubr.bf16.gmra.mrb[0].mxu0 %v777
        %v813 = vpop.f32.mrb[0].mxu0
        %v814 = vadd.f32 %v762, %v813
        %v815 = vpop.f32.mrb[0].mxu0
        %v816 = vpop.f32.mrb[0].mxu0
        %v817 = vpop.f32.mrb[0].mxu0
        %818 = vdwg.mxu0
        %819 = vst.msk [vmem:[%s597] sm:$0xff] %vm637, %v814
        %s820 = sand.u32 %s292, 1
        %s821 = scalar_lea.sflag [#allocation4], %s820
        %s822 = sand.u32 %s292, 1
        %s823 = smul.addr %s822, 8
        %s824 = scalar_lea.vmem [#allocation11], %s823
        %s825 = sand.u32 %s36, 1
        %s826 = scalar_lea.sflag [#allocation13], %s825
        %s827 = sand.u32 %s320, 1
        %s828 = smul.addr %s827, 8
        %s829 = scalar_lea.vmem [#allocation12], %s828
        %s830 = sand.u32 %s36, 1
        %s831 = scalar_lea.sflag [#allocation13], %s830
        %s832 = sand.u32 %s348, 1
        %s833 = smul.addr %s832, 8
        %s834 = scalar_lea.vmem [#allocation14], %s833
        // Predicated region
        $region77: #{tpu_custom_call.1} parent=55 // pred_check
          %p835 = pneg %p302
        $region78: #{tpu_custom_call.1} parent=55 // pred_check_branch
          %837 = sbr.rel (%p835) target = $region80
        $region79: #{tpu_custom_call.1} parent=55 // pred_region
          %s839 = ssub.s32 128, 128
          %840 = vsyncadd %s821, %s839
          %s841 = sadd.s32 %s41, %s40
          %s842 = smul.addr %s841, 128
          %s843 = scalar_lea.hbm %s9, %s842
          %s845 = sshll.u32 %s824, 4
          %s846 = int_to_ptr.vmem [resolvable:$true] %s845
          %848 = dma.vmem_to_hbm [thread:$0]  %s846, 128, %s843, %s821
        $region80: #{tpu_custom_call.1} parent=55 // pred_fallthru
          _
        // Predicated region
        $region81: #{tpu_custom_call.1} parent=55 // pred_check
          %p849 = pneg %p330
        $region82: #{tpu_custom_call.1} parent=55 // pred_check_branch
          %851 = sbr.rel (%p849) target = $region84
        $region83: #{tpu_custom_call.1} parent=55 // pred_region
          %s853 = ssub.s32 128, 128
          %854 = vsyncadd %s826, %s853
          %s855 = sadd.s32 %s41, %s40
          %s856 = smul.addr %s855, 128
          %s857 = scalar_lea.hbm %s10, %s856
          %s859 = sshll.u32 %s829, 4
          %s860 = int_to_ptr.vmem [resolvable:$true] %s859
          %862 = dma.vmem_to_hbm [thread:$0]  %s860, 128, %s857, %s826
        $region84: #{tpu_custom_call.1} parent=55 // pred_fallthru
          _
        // Predicated region
        $region85: #{tpu_custom_call.1} parent=55 // pred_check
          %p863 = pneg %p358
        $region86: #{tpu_custom_call.1} parent=55 // pred_check_branch
          %865 = sbr.rel (%p863) target = $region88
        $region87: #{tpu_custom_call.1} parent=55 // pred_region
          %s867 = ssub.s32 128, 128
          %868 = vsyncadd %s831, %s867
          %s869 = sadd.s32 %s41, %s40
          %s870 = smul.addr %s869, 128
          %s871 = scalar_lea.hbm %s11, %s870
          %s873 = sshll.u32 %s834, 4
          %s874 = int_to_ptr.vmem [resolvable:$true] %s873
          %876 = dma.vmem_to_hbm [thread:$0]  %s874, 128, %s871, %s831
        $region88: #{tpu_custom_call.1} parent=55 // pred_fallthru
          _
      $region56: #{tpu_custom_call.1} parent=5 // pred_fallthru
        _
      %p877 = scmp.le.s32.totalorder 2, %s31
      // Predicated region
      $region89: #{tpu_custom_call.1} parent=5 // pred_check
        %p878 = pneg %p877
      $region90: #{tpu_custom_call.1} parent=5 // pred_check_branch
        %880 = sbr.rel (%p878) target = $region92
      $region91: #{tpu_custom_call.1} parent=5 // pred_region
        %s881 = ssub.s32 %s31, 2
        // Predicated region
        $region93: #{tpu_custom_call.1} parent=91 // pred_check
          %p882 = pneg %p308
        $region94: #{tpu_custom_call.1} parent=91 // pred_check_branch
          %884 = sbr.rel (%p882) target = $region96
        $region95: #{tpu_custom_call.1} parent=91 // pred_region
          %s885 = sand.u32 %s293, 1
          %s886 = scalar_lea.sflag [#allocation4], %s885
          %s887 = sand.u32 %s293, 1
          %s888 = smul.addr %s887, 8
          %s889 = scalar_lea.vmem [#allocation11], %s888
          %890 = dma.done %s886, 128
        $region96: #{tpu_custom_call.1} parent=91 // pred_fallthru
          _
        // Predicated region
        $region97: #{tpu_custom_call.1} parent=91 // pred_check
          %p891 = pneg %p336
        $region98: #{tpu_custom_call.1} parent=91 // pred_check_branch
          %893 = sbr.rel (%p891) target = $region100
        $region99: #{tpu_custom_call.1} parent=91 // pred_region
          %s894 = sand.u32 %s37, 1
          %s895 = scalar_lea.sflag [#allocation13], %s894
          %s896 = sand.u32 %s321, 1
          %s897 = smul.addr %s896, 8
          %s898 = scalar_lea.vmem [#allocation12], %s897
          %899 = dma.done %s895, 128
        $region100: #{tpu_custom_call.1} parent=91 // pred_fallthru
          _
        // Predicated region
        $region101: #{tpu_custom_call.1} parent=91 // pred_check
          %p900 = pneg %p364
        $region102: #{tpu_custom_call.1} parent=91 // pred_check_branch
          %902 = sbr.rel (%p900) target = $region104
        $region103: #{tpu_custom_call.1} parent=91 // pred_region
          %s903 = sand.u32 %s37, 1
          %s904 = scalar_lea.sflag [#allocation13], %s903
          %s905 = sand.u32 %s349, 1
          %s906 = smul.addr %s905, 8
          %s907 = scalar_lea.vmem [#allocation14], %s906
          %908 = dma.done %s904, 128
        $region104: #{tpu_custom_call.1} parent=91 // pred_fallthru
          _
      $region92: #{tpu_custom_call.1} parent=5 // pred_fallthru
        _
    $region6: #{tpu_custom_call.1} parent=1 // loop_footer
      %s35 = sadd.s32 1, %s31
    $region7: #{tpu_custom_call.1} parent=1 // loop_footer_branch
      %30 = sbr.rel target = $region3
    $region8: #{tpu_custom_call.1} parent=1 // loop_exit
      _
    %909 = vsyncpa [#allocation3], 1
    %s910 = scalar_lea.sflag [#allocation3], 1
    %911 = vsyncpa %s910, 1
    %912 = vsyncpa [#allocation6], 1
    %s913 = scalar_lea.sflag [#allocation6], 1
    %914 = vsyncpa %s913, 1
    %915 = vsyncpa [#allocation9], 1
    %916 = vsyncpa [#allocation4], 1
    %s917 = scalar_lea.sflag [#allocation4], 1
    %918 = vsyncpa %s917, 1
    %919 = vsyncpa [#allocation13], 1
    %s920 = scalar_lea.sflag [#allocation13], 1
    %921 = vsyncpa %s920, 1

</llo_original>
